<compile_context>
chip_gen: v6e
topology: v6e:2x2x1
jax: 0.10.0
libtpu: 0.0.40
codegen_flags: <defaults>
</compile_context>

<pallas_src>
import math

import jax
import jax.numpy as jnp
from jax.experimental import pallas as pl
from jax.experimental.pallas import tpu as pltpu


def _round_up(x, m):
    return ((x + m - 1) // m) * m


def _mlp_kernel(x_ref, wfc_ref, bfc_ref, wproj_ref, bproj_ref, o_ref, acc_ref):
    # x_ref:     (tm, C)      tile of flattened tokens
    # wfc_ref:   (1, C, th)   pre-blocked slice of c_fc weight (contiguous DMA)
    # bfc_ref:   (1, th)      slice of c_fc bias
    # wproj_ref: (th, C)      slice of c_proj weight (in, out layout)
    # bproj_ref: (1, C)       c_proj bias
    # o_ref:     (tm, C)      output tile (written on the last reduction step)
    # acc_ref:   (tm, C)      f32 accumulator scratch (resident across j)
    j = pl.program_id(1)

    @pl.when(j == 0)
    def _():
        acc_ref[...] = jnp.zeros_like(acc_ref)

    # c_fc partial slab: MXU matmul in native operand dtype, f32 accumulation.
    h = jnp.dot(x_ref[...], wfc_ref[0], preferred_element_type=jnp.float32)
    h = h + bfc_ref[...].astype(jnp.float32)

    # tanh-approx GELU (matches torch.nn.GELU(approximate='tanh')), f32 math.
    c = 0.7978845608028654  # sqrt(2/pi)
    h2 = h * h
    g = 0.5 * h * (1.0 + jnp.tanh(c * h * (1.0 + 0.044715 * h2)))

    # c_proj partial: accumulate this hidden slice's contribution.
    acc_ref[...] += jnp.dot(g.astype(wproj_ref.dtype), wproj_ref[...],
                            preferred_element_type=jnp.float32)

    @pl.when(j == pl.num_programs(1) - 1)
    def _():
        o_ref[...] = (acc_ref[...]
                      + bproj_ref[...].astype(jnp.float32)).astype(o_ref.dtype)


def mlp_forward(x, w_fc, b_fc, w_proj, b_proj, *, tm=1024, th=1024):
    """GPT-2 MLP forward.

    x:      (B, T, C)
    w_fc:   (C, 4C)   (transpose of nn.Linear weight)
    b_fc:   (4C,)
    w_proj: (4C, C)
    b_proj: (C,)
    """
    B, T, C = x.shape
    H = w_fc.shape[1]
    M = B * T

    in_bytes = jnp.dtype(x.dtype).itemsize
    w_bytes = jnp.dtype(w_fc.dtype).itemsize

    # Sublane packing for the activation dtype (f32: 8, bf16: 16, int8/fp8: 32).
    pack = {4: 8, 2: 16, 1: 32}.get(in_bytes, 8)

    # Clamp tm for small M; keep >= 2 M tiles when possible so the "parallel"
    # grid axis can be sharded across both TensorCores on v7x.
    if M >= 2 * pack:
        max_tm = max(pack, _round_up((M + 1) // 2, pack))
    else:
        max_tm = _round_up(max(M, 1), pack)
    tm = max(pack, min(tm, max_tm))

    # Clamp th for small hidden dims; keep lane alignment (multiple of 128).
    th = max(128, min(th, _round_up(H, 128)))

    # Generation-aware VMEM budget (~80% of physical capacity).
    try:
        vmem_cap = int(pltpu.get_tpu_info().vmem_capacity_bytes)
    except Exception:
        vmem_cap = 64 << 20
    budget = int(0.8 * vmem_cap)

    def _vmem_est(tm_, th_):
        dbl = 2 * (tm_ * C * in_bytes        # x tile
                   + C * th_ * w_bytes       # c_fc weight slab
                   + th_ * w_bytes           # c_fc bias slab
                   + th_ * C * w_bytes       # c_proj weight slab
                   + C * w_bytes             # c_proj bias
                   + tm_ * C * in_bytes)     # output tile
        return dbl + tm_ * C * 4 + 2 * tm_ * th_ * 4  # f32 acc + h/g intermediates

    # Shrink tiles if the estimated working set overflows the budget.
    while _vmem_est(tm, th) > budget and th > 512:
        th = max(512, ((th // 2) // 128) * 128)
    while _vmem_est(tm, th) > budget and tm > 256:
        tm = max(256, ((tm // 2) // pack) * pack)
    est = _vmem_est(tm, th)

    Mp = _round_up(M, tm)
    Hp = _round_up(H, th)

    x2 = x.reshape(M, C)
    if Mp != M:
        x2 = jnp.pad(x2, ((0, Mp - M), (0, 0)))

    wf, bf, wp = w_fc, b_fc, w_proj
    if Hp != H:
        # Zero-padded hidden columns contribute exactly zero to the output
        # (GELU(0) = 0 and the matching w_proj rows are zero).
        wf = jnp.pad(wf, ((0, 0), (0, Hp - H)))
        bf = jnp.pad(bf, (0, Hp - H))
        wp = jnp.pad(wp, ((0, Hp - H), (0, 0)))

    nh = Hp // th
    # Pre-block c_fc weight so each (C, th) slab is a contiguous HBM region.
    wf_blk = wf.reshape(C, nh, th).transpose(1, 0, 2)   # (nh, C, th)
    bf2 = bf.reshape(1, Hp)
    bp2 = b_proj.reshape(1, C)

    grid = (Mp // tm, nh)
    n_i = Mp // tm

    cp = dict(dimension_semantics=("parallel", "arbitrary"))
    if est > (32 << 20):
        cp["vmem_limit_bytes"] = min(int(est * 1.25), budget)

    cost = pl.CostEstimate(
        flops=int(4 * Mp * C * Hp),                 # 2*M*C*H (c_fc) + 2*M*H*C (c_proj)
        transcendentals=int(Mp * Hp),               # one tanh per hidden element
        bytes_accessed=int(2 * Mp * C * in_bytes    # x read + out write
                           + n_i * 2 * Hp * C * w_bytes   # weights per M tile
                           + n_i * (Hp + C) * w_bytes),   # biases per M tile
    )

    out = pl.pallas_call(
        _mlp_kernel,
        out_shape=jax.ShapeDtypeStruct((Mp, C), x.dtype),
        grid_spec=pltpu.PrefetchScalarGridSpec(
            num_scalar_prefetch=0,
            grid=grid,
            in_specs=[
                pl.BlockSpec((tm, C), lambda i, j: (i, 0)),      # x tile
                pl.BlockSpec((1, C, th), lambda i, j: (j, 0, 0)),  # c_fc weight slab
                pl.BlockSpec((1, th), lambda i, j: (0, j)),      # c_fc bias slice
                pl.BlockSpec((th, C), lambda i, j: (j, 0)),      # c_proj weight slab
                pl.BlockSpec((1, C), lambda i, j: (0, 0)),       # c_proj bias
            ],
            out_specs=pl.BlockSpec((tm, C), lambda i, j: (i, 0)),
            scratch_shapes=[pltpu.VMEM((tm, C), jnp.float32)],
        ),
        compiler_params=pltpu.CompilerParams(**cp),
        cost_estimate=cost,
    )(x2, wf_blk, bf2, wp, bp2)

    return out[:M].reshape(B, T, C)


def mlp_reference(x, w_fc, b_fc, w_proj, b_proj):
    h = (x.astype(jnp.float32) @ w_fc.astype(jnp.float32)
         + b_fc.astype(jnp.float32))
    c = math.sqrt(2.0 / math.pi)
    g = 0.5 * h * (1.0 + jnp.tanh(c * (h + 0.044715 * h ** 3)))
    return g @ w_proj.astype(jnp.float32) + b_proj.astype(jnp.float32)


if __name__ == "__main__":
    # Small GPT-2-like config: batch=2, seq=8, n_embd=32 (hidden = 4*32 = 128)
    B, T, C = 2, 8, 32
    H = 4 * C

    key = jax.random.PRNGKey(0)
    kx, k1, k2, k3, k4 = jax.random.split(key, 5)

    x = jax.random.normal(kx, (B, T, C), dtype=jnp.float32)

    # Deterministic parameter init (same shapes as nn.Linear, stored transposed).
    bound_fc = 1.0 / math.sqrt(C)
    bound_pr = 1.0 / math.sqrt(H)
    w_fc = jax.random.uniform(k1, (C, H), minval=-bound_fc, maxval=bound_fc,
                              dtype=jnp.float32)
    b_fc = jax.random.uniform(k2, (H,), minval=-bound_fc, maxval=bound_fc,
                              dtype=jnp.float32)
    w_proj = jax.random.uniform(k3, (H, C), minval=-bound_pr, maxval=bound_pr,
                                dtype=jnp.float32)
    b_proj = jax.random.uniform(k4, (C,), minval=-bound_pr, maxval=bound_pr,
                                dtype=jnp.float32)

    # float32 path (strict correctness check).
    out = jax.block_until_ready(mlp_forward(x, w_fc, b_fc, w_proj, b_proj))
    ref = mlp_reference(x, w_fc, b_fc, w_proj, b_proj)
    assert out.shape == (B, T, C)
    assert jnp.allclose(out, ref, atol=1e-4, rtol=1e-4), "f32 mismatch vs reference"

    # bf16 operand path (native MXU rate, f32 accumulation) with loose tolerance.
    xb = x.astype(jnp.bfloat16)
    wfb, bfb = w_fc.astype(jnp.bfloat16), b_fc.astype(jnp.bfloat16)
    wpb, bpb = w_proj.astype(jnp.bfloat16), b_proj.astype(jnp.bfloat16)
    out_bf = jax.block_until_ready(mlp_forward(xb, wfb, bfb, wpb, bpb))
    ref_bf = mlp_reference(xb, wfb, bfb, wpb, bpb)
    assert out_bf.shape == (B, T, C)
    assert jnp.allclose(out_bf.astype(jnp.float32), ref_bf,
                        atol=5e-2, rtol=5e-2), "bf16 mismatch vs reference"

    print("KERNEL_OK")
</pallas_src>

<mosaic_0001>
module attributes {stable_mosaic.version = 11 : i64} {
  func.func @_mlp_kernel(%arg0: i32, %arg1: i32, %arg2: memref<8x32xf32, #tpu.memory_space<vmem>>, %arg3: memref<1x32x128xf32, #tpu.memory_space<vmem>>, %arg4: memref<1x128xf32, #tpu.memory_space<vmem>>, %arg5: memref<128x32xf32, #tpu.memory_space<vmem>>, %arg6: memref<1x32xf32, #tpu.memory_space<vmem>>, %arg7: memref<8x32xf32, #tpu.memory_space<vmem>>, %arg8: memref<8x32xf32, #tpu.memory_space<vmem>>) attributes {dimension_semantics = [#tpu.dimension_semantics<parallel>, #tpu.dimension_semantics<arbitrary>], iteration_bounds = array<i64: 2, 1>, scalar_prefetch = 0 : i64, scratch_operands = 1 : i64, tpu.core_type = #tpu.core_type<tc>, window_params = [{transform_indices = @transform_0, window_bounds = array<i64: 8, 32>}, {transform_indices = @transform_1, window_bounds = array<i64: 1, 32, 128>}, {transform_indices = @transform_2, window_bounds = array<i64: 1, 128>}, {transform_indices = @transform_3, window_bounds = array<i64: 128, 32>}, {pipeline_mode = #tpu.pipeline_mode<synchronous>, transform_indices = @transform_4, window_bounds = array<i64: 1, 32>}, {transform_indices = @transform_5, window_bounds = array<i64: 8, 32>}]} {
    %c0_i32 = arith.constant 0 : i32
    %0 = arith.cmpi eq, %arg1, %c0_i32 : i32
    %1 = arith.extui %0 : i1 to i32
    %c0_i32_0 = arith.constant 0 : i32
    %2 = arith.cmpi ne, %1, %c0_i32_0 : i32
    scf.if %2 {
      %cst_21 = arith.constant 0.000000e+00 : f32
      %32 = vector.broadcast %cst_21 : f32 to vector<8x32xf32>
      %c0_22 = arith.constant 0 : index
      %c0_23 = arith.constant 0 : index
      %33 = vector.load %arg8[%c0_22, %c0_23] : memref<8x32xf32, #tpu.memory_space<vmem>>, vector<8x32xf32>
      tpu.vector_store %arg8[%c0_22, %c0_23], %32 {strides = array<i32>} : memref<8x32xf32, #tpu.memory_space<vmem>>, vector<8x32xf32>,
    } else {
    }
    %c0 = arith.constant 0 : index
    %c0_1 = arith.constant 0 : index
    %3 = vector.load %arg2[%c0, %c0_1] : memref<8x32xf32, #tpu.memory_space<vmem>>, vector<8x32xf32>
    %c0_2 = arith.constant 0 : index
    %c0_3 = arith.constant 0 : index
    %c0_4 = arith.constant 0 : index
    %4 = vector.load %arg3[%c0_2, %c0_3, %c0_4] : memref<1x32x128xf32, #tpu.memory_space<vmem>>, vector<1x32x128xf32>
    %5 = vector.shape_cast %4 : vector<1x32x128xf32> to vector<32x128xf32>
    %cst = arith.constant dense<0.000000e+00> : vector<8x128xf32>
    %6 = tpu.matmul %3, %5, %cst {dimension_numbers = #tpu.dot_dimension_numbers<[1], [0], [0], [1], [0, 0, 1, 1], [], []>} : vector<8x32xf32>, vector<32x128xf32>, vector<8x128xf32> -> vector<8x128xf32>
    %c0_5 = arith.constant 0 : index
    %c0_6 = arith.constant 0 : index
    %7 = vector.load %arg4[%c0_5, %c0_6] : memref<1x128xf32, #tpu.memory_space<vmem>>, vector<1x128xf32>
    %8 = vector.broadcast %7 : vector<1x128xf32> to vector<8x128xf32>
    %9 = arith.addf %6, %8 : vector<8x128xf32>
    %10 = arith.mulf %9, %9 : vector<8x128xf32>
    %cst_7 = arith.constant 5.000000e-01 : f32
    %11 = vector.broadcast %cst_7 : f32 to vector<8x128xf32>
    %12 = arith.mulf %11, %9 : vector<8x128xf32>
    %cst_8 = arith.constant 0.797884583 : f32
    %13 = vector.broadcast %cst_8 : f32 to vector<8x128xf32>
    %14 = arith.mulf %13, %9 : vector<8x128xf32>
    %cst_9 = arith.constant 4.471500e-02 : f32
    %15 = vector.broadcast %cst_9 : f32 to vector<8x128xf32>
    %16 = arith.mulf %15, %10 : vector<8x128xf32>
    %cst_10 = arith.constant 1.000000e+00 : f32
    %17 = vector.broadcast %cst_10 : f32 to vector<8x128xf32>
    %18 = arith.addf %17, %16 : vector<8x128xf32>
    %19 = arith.mulf %14, %18 : vector<8x128xf32>
    %20 = math.tanh %19 : vector<8x128xf32>
    %cst_11 = arith.constant 1.000000e+00 : f32
    %21 = vector.broadcast %cst_11 : f32 to vector<8x128xf32>
    %22 = arith.addf %21, %20 : vector<8x128xf32>
    %23 = arith.mulf %12, %22 : vector<8x128xf32>
    %c0_12 = arith.constant 0 : index
    %c0_13 = arith.constant 0 : index
    %24 = vector.load %arg8[%c0_12, %c0_13] : memref<8x32xf32, #tpu.memory_space<vmem>>, vector<8x32xf32>
    %c0_14 = arith.constant 0 : index
    %c0_15 = arith.constant 0 : index
    %25 = vector.load %arg5[%c0_14, %c0_15] : memref<128x32xf32, #tpu.memory_space<vmem>>, vector<128x32xf32>
    %cst_16 = arith.constant dense<0.000000e+00> : vector<8x32xf32>
    %26 = tpu.matmul %23, %25, %cst_16 {dimension_numbers = #tpu.dot_dimension_numbers<[1], [0], [0], [1], [0, 0, 1, 1], [], []>} : vector<8x128xf32>, vector<128x32xf32>, vector<8x32xf32> -> vector<8x32xf32>
    %27 = arith.addf %24, %26 : vector<8x32xf32>
    %c0_17 = arith.constant 0 : index
    %c0_18 = arith.constant 0 : index
    %28 = vector.load %arg8[%c0_17, %c0_18] : memref<8x32xf32, #tpu.memory_space<vmem>>, vector<8x32xf32>
    tpu.vector_store %arg8[%c0_17, %c0_18], %27 {strides = array<i32>} : memref<8x32xf32, #tpu.memory_space<vmem>>, vector<8x32xf32>,
    %c0_i32_19 = arith.constant 0 : i32
    %29 = arith.cmpi eq, %arg1, %c0_i32_19 : i32
    %30 = arith.extui %29 : i1 to i32
    %c0_i32_20 = arith.constant 0 : i32
    %31 = arith.cmpi ne, %30, %c0_i32_20 : i32
    scf.if %31 {
      %c0_21 = arith.constant 0 : index
      %c0_22 = arith.constant 0 : index
      %32 = vector.load %arg8[%c0_21, %c0_22] : memref<8x32xf32, #tpu.memory_space<vmem>>, vector<8x32xf32>
      %c0_23 = arith.constant 0 : index
      %c0_24 = arith.constant 0 : index
      %33 = vector.load %arg6[%c0_23, %c0_24] : memref<1x32xf32, #tpu.memory_space<vmem>>, vector<1x32xf32>
      %34 = vector.broadcast %33 : vector<1x32xf32> to vector<8x32xf32>
      %35 = arith.addf %32, %34 : vector<8x32xf32>
      %c0_25 = arith.constant 0 : index
      %c0_26 = arith.constant 0 : index
      %36 = vector.load %arg7[%c0_25, %c0_26] : memref<8x32xf32, #tpu.memory_space<vmem>>, vector<8x32xf32>
      tpu.vector_store %arg7[%c0_25, %c0_26], %35 {strides = array<i32>} : memref<8x32xf32, #tpu.memory_space<vmem>>, vector<8x32xf32>,
    } else {
    }
    return
  }
  func.func @transform_0(%arg0: i32, %arg1: i32) -> (i32, i32) {
    %c0_i32 = arith.constant 0 : i32
    %c0_i32_0 = arith.constant 0 : i32
    return %arg0, %c0_i32 : i32, i32
  }
  func.func @transform_1(%arg0: i32, %arg1: i32) -> (i32, i32, i32) {
    %c0_i32 = arith.constant 0 : i32
    %c0_i32_0 = arith.constant 0 : i32
    %c0_i32_1 = arith.constant 0 : i32
    return %arg1, %c0_i32, %c0_i32_0 : i32, i32, i32
  }
  func.func @transform_2(%arg0: i32, %arg1: i32) -> (i32, i32) {
    %c0_i32 = arith.constant 0 : i32
    %c0_i32_0 = arith.constant 0 : i32
    return %c0_i32, %arg1 : i32, i32
  }
  func.func @transform_3(%arg0: i32, %arg1: i32) -> (i32, i32) {
    %c0_i32 = arith.constant 0 : i32
    %c0_i32_0 = arith.constant 0 : i32
    return %arg1, %c0_i32 : i32, i32
  }
  func.func @transform_4(%arg0: i32, %arg1: i32) -> (i32, i32) {
    %c0_i32 = arith.constant 0 : i32
    %c0_i32_0 = arith.constant 0 : i32
    %c0_i32_1 = arith.constant 0 : i32
    return %c0_i32, %c0_i32_0 : i32, i32
  }
  func.func @transform_5(%arg0: i32, %arg1: i32) -> (i32, i32) {
    %c0_i32 = arith.constant 0 : i32
    %c0_i32_0 = arith.constant 0 : i32
    return %arg0, %c0_i32 : i32, i32
  }
}

</mosaic_0001>

<llo_original>
// kernel: tpu_custom_call.1
$region0: #{tpu_custom_call.1}
  #allocation0 [shape = 'u32[]', space=smem, size = 0x4, offset = 0x4, fixed_abs, tag = 'smem constant byte address 0x4 - core index']
  #allocation1 [shape = 'u32[144,128]{1,0:T(1,128)}', space=vmem, size = 0x12000, scoped, tag = 'internal scratch']
  #allocation2 [shape = 'f32[8,32]{1,0:T(8,128)}', space=vmem, size = 0x1000, scoped, tag = 'scratch operand']
  %s0 = inlined_call_operand.vmem [shape: f32[16,32], index: 0, kind: input, shape index: {}]
  %s1 = inlined_call_operand.vmem [shape: f32[1,32,128], index: 1, kind: input, shape index: {}]
  %s2 = inlined_call_operand.vmem [shape: f32[1,128], index: 2, kind: input, shape index: {}]
  %s3 = inlined_call_operand.vmem [shape: f32[128,32], index: 3, kind: input, shape index: {}]
  %s4 = inlined_call_operand.vmem [shape: f32[1,32], index: 4, kind: input, shape index: {}]
  %s5 = inlined_call_operand.hbm [shape: f32[16,32], index: 5, kind: output, shape index: {}]
  %s6 = sld [smem:[#allocation0]]
  $region61: #{tpu_custom_call.1} parent=0
    _
  %s8 = ssub.s32 1, %s6
  %s9 = scalar_select 0, %s8, %s6
  $region1: #{tpu_custom_call.1} parent=0
    #allocation3 [shape = 'u8[8192]{0}', space=vmem, size = 0x2000, scoped, tag = 'output window, operand 0']
    #allocation4 [shape = 's32[2]{0}', space=sflag, size = 0x8, scoped, tag = 'scoped memory for tpu_custom_call.1']
    %10 = vsyncpa [#allocation4], 0
    %s11 = scalar_lea.sflag [#allocation4], 1
    %12 = vsyncpa %s11, 0
    loop: start=0, step=1, limit=4
    $region2: #{tpu_custom_call.1} parent=1 // loop_pre_header
      _
    $region3: #{tpu_custom_call.1} parent=1 // loop_header
      %s14 = sphi 0, %s18
      %p15 = scmp.ge.s32.totalorder %s14, 4
      %s21 = sphi 0, %s33
      %s22 = sphi 0, %s29
      %s23 = sphi 0, %s21
      %s24 = sphi 0, %s22
      %s25 = sphi 0, %s23
      %s26 = sphi 0, %s24
      %s36 = sphi 0, %s38
      %s39 = sphi 0, %s36
      %s40 = sphi 0, %s39
      %s56 = sphi 0, %s40
      %s62 = sphi 0, %s64
      %s65 = sphi 0, %s62
      %s66 = sphi 0, %s65
      %s82 = sphi 0, %s66
      %s88 = sphi 0, %s90
      %s91 = sphi 0, %s88
      %s92 = sphi 0, %s91
      %s108 = sphi 0, %s92
      %s114 = sphi 0, %s116
      %s117 = sphi 0, %s114
      %s118 = sphi 0, %s117
      %s134 = sphi 0, %s118
      %s138 = sphi 0, %s138
      %s140 = sphi 0, %s138
      %s141 = sphi 0, %s140
      %s155 = sphi 0, %s141
      %s161 = sphi 0, %s163
      %s164 = sphi 0, %s161
      %s165 = sphi 0, %s164
      %s181 = sphi 0, %s165
    $region4: #{tpu_custom_call.1} parent=1 // loop_header_branch
      %17 = sbr.rel (%p15) target = $region8
    $region5: #{tpu_custom_call.1} parent=1 // loop_body
      %s19 = ssub.s32 %s14, 1
      %s20 = ssub.s32 %s14, 2
      %s27 = sadd.s32 1, %s22
      %p28 = scmp.ge.s32.totalorder %s27, 1
      %s29 = scalar_select %p28, 0, %s27
      %s30 = sadd.s32 1, %s21
      %s31 = scalar_select %p28, %s30, %s21
      %p32 = scmp.ge.s32.totalorder %s31, 2
      %s33 = scalar_select %p32, 0, %s31
      %s34 = ssub.s32 %s21, %s33
      %p35 = scmp.eq.s32.totalorder %s34, 0
      %s37 = sadd.s32 %s36, 1
      %s38 = scalar_select %p35, %s36, %s37
      %p41 = pneg %p35
      %p42 = scmp.eq.s32.totalorder %s14, 1
      %p43 = por %p41, %p42
      %p44 = scmp.ne.s32.totalorder %s36, %s39
      %p45 = scmp.eq.s32.totalorder %s14, 0
      %p46 = por %p44, %p45
      %p47 = scmp.ne.s32.totalorder %s36, %s39
      %p48 = scmp.eq.s32.totalorder %s19, 1
      %p49 = por %p47, %p48
      %p50 = scmp.ne.s32.totalorder %s39, %s40
      %p51 = scmp.eq.s32.totalorder %s19, 0
      %p52 = por %p50, %p51
      %p53 = scmp.ne.s32.totalorder %s39, %s40
      %p54 = scmp.eq.s32.totalorder %s20, 1
      %p55 = por %p53, %p54
      %p57 = scmp.ne.s32.totalorder %s40, %s56
      %p58 = scmp.eq.s32.totalorder %s20, 0
      %p59 = por %p57, %p58
      %s60 = ssub.s32 %s22, %s29
      %p61 = scmp.eq.s32.totalorder %s60, 0
      %s63 = sadd.s32 %s62, 1
      %s64 = scalar_select %p61, %s62, %s63
      %p67 = pneg %p61
      %p68 = scmp.eq.s32.totalorder %s14, 1
      %p69 = por %p67, %p68
      %p70 = scmp.ne.s32.totalorder %s62, %s65
      %p71 = scmp.eq.s32.totalorder %s14, 0
      %p72 = por %p70, %p71
      %p73 = scmp.ne.s32.totalorder %s62, %s65
      %p74 = scmp.eq.s32.totalorder %s19, 1
      %p75 = por %p73, %p74
      %p76 = scmp.ne.s32.totalorder %s65, %s66
      %p77 = scmp.eq.s32.totalorder %s19, 0
      %p78 = por %p76, %p77
      %p79 = scmp.ne.s32.totalorder %s65, %s66
      %p80 = scmp.eq.s32.totalorder %s20, 1
      %p81 = por %p79, %p80
      %p83 = scmp.ne.s32.totalorder %s66, %s82
      %p84 = scmp.eq.s32.totalorder %s20, 0
      %p85 = por %p83, %p84
      %s86 = ssub.s32 %s22, %s29
      %p87 = scmp.eq.s32.totalorder %s86, 0
      %s89 = sadd.s32 %s88, 1
      %s90 = scalar_select %p87, %s88, %s89
      %p93 = pneg %p87
      %p94 = scmp.eq.s32.totalorder %s14, 1
      %p95 = por %p93, %p94
      %p96 = scmp.ne.s32.totalorder %s88, %s91
      %p97 = scmp.eq.s32.totalorder %s14, 0
      %p98 = por %p96, %p97
      %p99 = scmp.ne.s32.totalorder %s88, %s91
      %p100 = scmp.eq.s32.totalorder %s19, 1
      %p101 = por %p99, %p100
      %p102 = scmp.ne.s32.totalorder %s91, %s92
      %p103 = scmp.eq.s32.totalorder %s19, 0
      %p104 = por %p102, %p103
      %p105 = scmp.ne.s32.totalorder %s91, %s92
      %p106 = scmp.eq.s32.totalorder %s20, 1
      %p107 = por %p105, %p106
      %p109 = scmp.ne.s32.totalorder %s92, %s108
      %p110 = scmp.eq.s32.totalorder %s20, 0
      %p111 = por %p109, %p110
      %s112 = ssub.s32 %s22, %s29
      %p113 = scmp.eq.s32.totalorder %s112, 0
      %s115 = sadd.s32 %s114, 1
      %s116 = scalar_select %p113, %s114, %s115
      %p119 = pneg %p113
      %p120 = scmp.eq.s32.totalorder %s14, 1
      %p121 = por %p119, %p120
      %p122 = scmp.ne.s32.totalorder %s114, %s117
      %p123 = scmp.eq.s32.totalorder %s14, 0
      %p124 = por %p122, %p123
      %p125 = scmp.ne.s32.totalorder %s114, %s117
      %p126 = scmp.eq.s32.totalorder %s19, 1
      %p127 = por %p125, %p126
      %p128 = scmp.ne.s32.totalorder %s117, %s118
      %p129 = scmp.eq.s32.totalorder %s19, 0
      %p130 = por %p128, %p129
      %p131 = scmp.ne.s32.totalorder %s117, %s118
      %p132 = scmp.eq.s32.totalorder %s20, 1
      %p133 = por %p131, %p132
      %p135 = scmp.ne.s32.totalorder %s118, %s134
      %p136 = scmp.eq.s32.totalorder %s20, 0
      %p137 = por %p135, %p136
      %s139 = sadd.s32 %s138, 1
      %p142 = scmp.eq.s32.totalorder %s14, 1
      %p143 = scmp.ne.s32.totalorder %s138, %s140
      %p144 = scmp.eq.s32.totalorder %s14, 0
      %p145 = por %p143, %p144
      %p146 = scmp.ne.s32.totalorder %s138, %s140
      %p147 = scmp.eq.s32.totalorder %s19, 1
      %p148 = por %p146, %p147
      %p149 = scmp.ne.s32.totalorder %s140, %s141
      %p150 = scmp.eq.s32.totalorder %s19, 0
      %p151 = por %p149, %p150
      %p152 = scmp.ne.s32.totalorder %s140, %s141
      %p153 = scmp.eq.s32.totalorder %s20, 1
      %p154 = por %p152, %p153
      %p156 = scmp.ne.s32.totalorder %s141, %s155
      %p157 = scmp.eq.s32.totalorder %s20, 0
      %p158 = por %p156, %p157
      %s159 = ssub.s32 %s21, %s33
      %p160 = scmp.eq.s32.totalorder %s159, 0
      %s162 = sadd.s32 %s161, 1
      %s163 = scalar_select %p160, %s161, %s162
      %p166 = pneg %p160
      %p167 = scmp.eq.s32.totalorder %s14, 1
      %p168 = por %p166, %p167
      %p169 = scmp.ne.s32.totalorder %s161, %s164
      %p170 = scmp.eq.s32.totalorder %s14, 0
      %p171 = por %p169, %p170
      %p172 = scmp.ne.s32.totalorder %s161, %s164
      %p173 = scmp.eq.s32.totalorder %s19, 1
      %p174 = por %p172, %p173
      %p175 = scmp.ne.s32.totalorder %s164, %s165
      %p176 = scmp.eq.s32.totalorder %s19, 0
      %p177 = por %p175, %p176
      %p178 = scmp.ne.s32.totalorder %s164, %s165
      %p179 = scmp.eq.s32.totalorder %s20, 1
      %p180 = por %p178, %p179
      %p182 = scmp.ne.s32.totalorder %s165, %s181
      %p183 = scmp.eq.s32.totalorder %s20, 0
      %p184 = por %p182, %p183
      %p185 = scmp.le.s32.totalorder 1, %s14
      %p186 = scmp.lt.s32.totalorder %s14, 3
      %p187 = pnand %p185, %p186
      %p188 = pneg %p187
      // Predicated region
      $region9: #{tpu_custom_call.1} parent=5 // pred_check
        _
      $region10: #{tpu_custom_call.1} parent=5 // pred_check_branch
        %190 = sbr.rel (%p187) target = $region12
      $region11: #{tpu_custom_call.1} parent=5 // pred_region
        %s191 = ssub.s32 %s14, 1
        // Predicated region
        $region13: #{tpu_custom_call.1} parent=11 // pred_check
          %p192 = pneg %p78
        $region14: #{tpu_custom_call.1} parent=11 // pred_check_branch
          %194 = sbr.rel (%p192) target = $region16
        $region15: #{tpu_custom_call.1} parent=11 // pred_region
          %p195 = scmp.lt.s32.totalorder %s24, 0
          %s196 = scalar_select %p195, %s24, 0
          %s197 = smul.addr %s196, 4
          %s198 = smul.addr %s197, 8
          %s199 = scalar_lea.vmem %s1, %s198
        $region16: #{tpu_custom_call.1} parent=11 // pred_fallthru
          _
        // Predicated region
        $region17: #{tpu_custom_call.1} parent=11 // pred_check
          %p200 = pneg %p104
        $region18: #{tpu_custom_call.1} parent=11 // pred_check_branch
          %202 = sbr.rel (%p200) target = $region20
        $region19: #{tpu_custom_call.1} parent=11 // pred_region
          %p203 = scmp.lt.s32.totalorder %s24, 0
          %s204 = scalar_select %p203, %s24, 0
          %s205 = scalar_lea.vmem %s2, %s204
        $region20: #{tpu_custom_call.1} parent=11 // pred_fallthru
          _
        // Predicated region
        $region21: #{tpu_custom_call.1} parent=11 // pred_check
          %p206 = pneg %p130
        $region22: #{tpu_custom_call.1} parent=11 // pred_check_branch
          %208 = sbr.rel (%p206) target = $region24
        $region23: #{tpu_custom_call.1} parent=11 // pred_region
          %s209 = smul.u32 16, %s24
          %p210 = scmp.lt.s32.totalorder %s209, 15
          %s211 = scalar_select %p210, %s209, 15
          %s212 = smul.addr %s211, 8
          %s213 = scalar_lea.vmem %s3, %s212
          %s214 = smul.u32 16, %s24
        $region24: #{tpu_custom_call.1} parent=11 // pred_fallthru
          _
        // Predicated region
        $region25: #{tpu_custom_call.1} parent=11 // pred_check
          %p215 = pneg %p151
        $region26: #{tpu_custom_call.1} parent=11 // pred_check_branch
          %217 = sbr.rel (%p215) target = $region28
        $region27: #{tpu_custom_call.1} parent=11 // pred_region
          _
        $region28: #{tpu_custom_call.1} parent=11 // pred_fallthru
          _
      $region12: #{tpu_custom_call.1} parent=5 // pred_fallthru
        _
      %p218 = scmp.lt.s32.totalorder %s14, 2
      // Predicated region
      $region29: #{tpu_custom_call.1} parent=5 // pred_check
        %p219 = pneg %p218
      $region30: #{tpu_custom_call.1} parent=5 // pred_check_branch
        %221 = sbr.rel (%p219) target = $region32
      $region31: #{tpu_custom_call.1} parent=5 // pred_region
        // Predicated region
        $region33: #{tpu_custom_call.1} parent=31 // pred_check
          %p222 = pneg %p46
        $region34: #{tpu_custom_call.1} parent=31 // pred_check_branch
          %224 = sbr.rel (%p222) target = $region36
        $region35: #{tpu_custom_call.1} parent=31 // pred_region
          %p225 = scmp.lt.s32.totalorder %s21, 1
          %s226 = scalar_select %p225, %s21, 1
          %s227 = smul.addr %s226, 8
          %s228 = scalar_lea.vmem %s0, %s227
        $region36: #{tpu_custom_call.1} parent=31 // pred_fallthru
          _
      $region32: #{tpu_custom_call.1} parent=5 // pred_fallthru
        _
      %p229 = scmp.le.s32.totalorder 1, %s14
      %p230 = scmp.lt.s32.totalorder %s14, 3
      %p231 = pnand %p229, %p230
      %p232 = pneg %p231
      // Predicated region
      $region37: #{tpu_custom_call.1} parent=5 // pred_check
        _
      $region38: #{tpu_custom_call.1} parent=5 // pred_check_branch
        %234 = sbr.rel (%p231) target = $region40
      $region39: #{tpu_custom_call.1} parent=5 // pred_region
        %s235 = ssub.s32 %s14, 1
        %p236 = scmp.lt.s32.totalorder %s23, 1
        %s237 = scalar_select %p236, %s23, 1
        %s238 = smul.addr %s237, 8
        %s239 = scalar_lea.vmem %s0, %s238
        %p240 = pneg %p52
        %p241 = pneg %p49
        %p242 = scmp.lt.s32.totalorder %s24, 0
        %s243 = scalar_select %p242, %s24, 0
        %s244 = smul.addr %s243, 4
        %s245 = smul.addr %s244, 8
        %s246 = scalar_lea.vmem %s1, %s245
        %p247 = pneg %p78
        %p248 = pneg %p75
        %p249 = scmp.lt.s32.totalorder %s24, 0
        %s250 = scalar_select %p249, %s24, 0
        %s251 = scalar_lea.vmem %s2, %s250
        %p252 = pneg %p104
        %p253 = pneg %p101
        %s254 = smul.u32 16, %s24
        %p255 = scmp.lt.s32.totalorder %s254, 15
        %s256 = scalar_select %p255, %s254, 15
        %s257 = smul.addr %s256, 8
        %s258 = scalar_lea.vmem %s3, %s257
        %p259 = pneg %p130
        %p260 = pneg %p127
        %p261 = pneg %p151
        %p262 = pneg %p148
        %p263 = pneg %p177
        %p264 = pneg %p174
        %s265 = sand.u32 %s164, 1
        %s266 = scalar_lea.sflag [#allocation4], %s265
        %s267 = sand.u32 %s164, 1
        %s268 = smul.addr %s267, 8
        %s269 = scalar_lea.vmem [#allocation3], %s268
        %p270 = scmp.lt.s32.totalorder %s23, 1
        %s271 = scalar_select %p270, %s23, 1
        %s272 = smul.addr %s271, 8
        %s273 = scalar_lea.vmem %s0, %s272
        %p274 = scmp.lt.s32.totalorder %s24, 0
        %s275 = scalar_select %p274, %s24, 0
        %s276 = smul.addr %s275, 4
        %s277 = smul.addr %s276, 8
        %s278 = scalar_lea.vmem %s1, %s277
        %p279 = scmp.lt.s32.totalorder %s24, 0
        %s280 = scalar_select %p279, %s24, 0
        %s281 = scalar_lea.vmem %s2, %s280
        %s282 = smul.u32 16, %s24
        %p283 = scmp.lt.s32.totalorder %s282, 15
        %s284 = scalar_select %p283, %s282, 15
        %s285 = smul.addr %s284, 8
        %s286 = scalar_lea.vmem %s3, %s285
        %s287 = smul.u32 16, %s24
        %p288 = scmp.eq.s32.totalorder %s24, 0
        // Predicated region
        $region41: #{tpu_custom_call.1} parent=39 // pred_check
          %p289 = pneg %p288
        $region42: #{tpu_custom_call.1} parent=39 // pred_check_branch
          %291 = sbr.rel (%p289) target = $region44
        $region43: #{tpu_custom_call.1} parent=39 // pred_region
          %vm292 = vcmask 261120
          %293 = vst.msk [vmem:[#allocation2] sm:$0xff] %vm292, 0.0
        $region44: #{tpu_custom_call.1} parent=39 // pred_fallthru
          _
        %v294 = vld [vmem:[%s273] sm:$0xff]
        %v295 = vld [vmem:[%s278] sm:$0xff]
        %v296 = vld [vmem:[%s278 + $0x8] sm:$0xff]
        %v297 = vld [vmem:[%s278 + $0x10] sm:$0xff]
        %v298 = vld [vmem:[%s278 + $0x18] sm:$0xff]
        %v299 = vld [vmem:[%s281] sm:$0x1]
        %v301 = vlaneseq
        %v302 = vshrl.u32 %v301, 7
        %v303 = vsub.s32 0, %v302
        %v304 = vrot.slane %v299, %v303
        %vm306 = vcmask 261120
        %v308 = vsel %vm306, %v294, 0
        %310 = vmatprep.subr.mxu0 0.0
        %311 = vmatpush1.msra.mxu0 0.0
        %312 = vmatprep.subr.mxu0 0.0
        %313 = vmatpush1.msra.mxu0 0.0
        %314 = vmatprep.subr.mxu0 0.0
        %315 = vmatpush1.msra.mxu0 0.0
        %316 = vmatprep.subr.mxu0 0.0
        %317 = vmatpush1.msra.mxu0 0.0
        %318 = vmatprep.subr.mxu0 0.0
        %319 = vmatpush1.msra.mxu0 0.0
        %320 = vmatprep.subr.mxu0 0.0
        %321 = vmatpush1.msra.mxu0 0.0
        %322 = vmatprep.subr.mxu0 0.0
        %323 = vmatpush1.msra.mxu0 0.0
        %324 = vmatprep.subr.mxu0 0.0
        %325 = vmatpush1.msra.mxu0 0.0
        %326 = vmatprep.subr.mxu0 0.0
        %327 = vmatpush1.msra.mxu0 0.0
        %328 = vmatprep.subr.mxu0 0.0
        %329 = vmatpush1.msra.mxu0 0.0
        %330 = vmatprep.subr.mxu0 0.0
        %331 = vmatpush1.msra.mxu0 0.0
        %332 = vmatprep.subr.mxu0 0.0
        %333 = vmatpush1.msra.mxu0 0.0
        %334 = vmatprep.subr.mxu0 0.0
        %335 = vmatpush1.msra.mxu0 %v298
        %336 = vmatprep.subr.mxu0 0.0
        %337 = vmatpush1.msra.mxu0 %v297
        %338 = vmatprep.subr.mxu0 0.0
        %339 = vmatpush1.msra.mxu0 %v296
        %340 = vmatprep.subr.mxu0 0.0
        %341 = vmatpush1.msra.mxu0 %v295
        %342 = vmatprep.subr.mxu0 0.0
        %343 = vmatpush2.msra.mxu0 0.0
        %344 = vmatprep.subr.mxu0 0.0
        %345 = vmatpush2.msra.mxu0 0.0
        %346 = vmatprep.subr.mxu0 0.0
        %347 = vmatpush2.msra.mxu0 0.0
        %348 = vmatprep.subr.mxu0 0.0
        %349 = vmatpush2.msra.mxu0 0.0
        %350 = vmatprep.subr.mxu0 0.0
        %351 = vmatpush2.msra.mxu0 0.0
        %352 = vmatprep.subr.mxu0 0.0
        %353 = vmatpush2.msra.mxu0 0.0
        %354 = vmatprep.subr.mxu0 0.0
        %355 = vmatpush2.msra.mxu0 0.0
        %356 = vmatprep.subr.mxu0 0.0
        %357 = vmatpush2.msra.mxu0 0.0
        %358 = vmatprep.subr.mxu0 0.0
        %359 = vmatpush2.msra.mxu0 0.0
        %360 = vmatprep.subr.mxu0 0.0
        %361 = vmatpush2.msra.mxu0 0.0
        %362 = vmatprep.subr.mxu0 0.0
        %363 = vmatpush2.msra.mxu0 0.0
        %364 = vmatprep.subr.mxu0 0.0
        %365 = vmatpush2.msra.mxu0 0.0
        %366 = vmatprep.subr.mxu0 0.0
        %367 = vmatpush2.msra.mxu0 0.0
        %368 = vmatprep.subr.mxu0 0.0
        %369 = vmatpush2.msra.mxu0 0.0
        %370 = vmatprep.subr.mxu0 0.0
        %371 = vmatpush2.msra.mxu0 0.0
        %372 = vmatprep.subr.mxu0 0.0
        %373 = vmatpush2.msra.mxu0 0.0
        %374 = vmatprep.mubr.f32.mxu0 0.0
        %375 = vmatmul.mubr.f32.gmra.mxu0 %v308
        %v376 = vpop.f32.mrf.mxu0
        %v377 = vadd.f32 %v304, %v376
        %v378 = vpop.f32.mrf.mxu0
        %379 = vdwg.mxu0
        %v380 = vmul.f32 %v377, %v377
        %v381 = vmul.f32 %v377, 0.5
        %v382 = vmul.f32 %v377, 0.7978846
        %v383 = vmul.f32 %v380, 0.044715
        %v384 = vadd.f32 %v383, 1.0
        %v385 = vmul.f32 %v382, %v384
        %v386 = vtanh.pop %v385
        %v387 = vadd.f32 %v386, 1.0
        %v388 = vmul.f32 %v381, %v387
        %v389 = vld [vmem:[#allocation2] sm:$0xff]
        %v390 = vld [vmem:[%s286] sm:$0xff]
        %v391 = vld [vmem:[%s286 + $0x8] sm:$0xff]
        %v392 = vld [vmem:[%s286 + $0x10] sm:$0xff]
        %v393 = vld [vmem:[%s286 + $0x18] sm:$0xff]
        %v394 = vld [vmem:[%s286 + $0x20] sm:$0xff]
        %v395 = vld [vmem:[%s286 + $0x28] sm:$0xff]
        %v396 = vld [vmem:[%s286 + $0x30] sm:$0xff]
        %v397 = vld [vmem:[%s286 + $0x38] sm:$0xff]
        %v398 = vld [vmem:[%s286 + $0x40] sm:$0xff]
        %v399 = vld [vmem:[%s286 + $0x48] sm:$0xff]
        %v400 = vld [vmem:[%s286 + $0x50] sm:$0xff]
        %v401 = vld [vmem:[%s286 + $0x58] sm:$0xff]
        %v402 = vld [vmem:[%s286 + $0x60] sm:$0xff]
        %v403 = vld [vmem:[%s286 + $0x68] sm:$0xff]
        %v404 = vld [vmem:[%s286 + $0x70] sm:$0xff]
        %v405 = vld [vmem:[%s286 + $0x78] sm:$0xff]
        %406 = vmatprep.subr.mxu0 0.0
        %407 = vmatpush1.msra.mxu0 %v405
        %408 = vmatprep.subr.mxu0 0.0
        %409 = vmatpush1.msra.mxu0 %v404
        %410 = vmatprep.subr.mxu0 0.0
        %411 = vmatpush1.msra.mxu0 %v403
        %412 = vmatprep.subr.mxu0 0.0
        %413 = vmatpush1.msra.mxu0 %v402
        %414 = vmatprep.subr.mxu0 0.0
        %415 = vmatpush1.msra.mxu0 %v401
        %416 = vmatprep.subr.mxu0 0.0
        %417 = vmatpush1.msra.mxu0 %v400
        %418 = vmatprep.subr.mxu0 0.0
        %419 = vmatpush1.msra.mxu0 %v399
        %420 = vmatprep.subr.mxu0 0.0
        %421 = vmatpush1.msra.mxu0 %v398
        %422 = vmatprep.subr.mxu0 0.0
        %423 = vmatpush1.msra.mxu0 %v397
        %424 = vmatprep.subr.mxu0 0.0
        %425 = vmatpush1.msra.mxu0 %v396
        %426 = vmatprep.subr.mxu0 0.0
        %427 = vmatpush1.msra.mxu0 %v395
        %428 = vmatprep.subr.mxu0 0.0
        %429 = vmatpush1.msra.mxu0 %v394
        %430 = vmatprep.subr.mxu0 0.0
        %431 = vmatpush1.msra.mxu0 %v393
        %432 = vmatprep.subr.mxu0 0.0
        %433 = vmatpush1.msra.mxu0 %v392
        %434 = vmatprep.subr.mxu0 0.0
        %435 = vmatpush1.msra.mxu0 %v391
        %436 = vmatprep.subr.mxu0 0.0
        %437 = vmatpush1.msra.mxu0 %v390
        %438 = vmatprep.subr.mxu0 0.0
        %439 = vmatpush2.msra.mxu0 0.0
        %440 = vmatprep.subr.mxu0 0.0
        %441 = vmatpush2.msra.mxu0 0.0
        %442 = vmatprep.subr.mxu0 0.0
        %443 = vmatpush2.msra.mxu0 0.0
        %444 = vmatprep.subr.mxu0 0.0
        %445 = vmatpush2.msra.mxu0 0.0
        %446 = vmatprep.subr.mxu0 0.0
        %447 = vmatpush2.msra.mxu0 0.0
        %448 = vmatprep.subr.mxu0 0.0
        %449 = vmatpush2.msra.mxu0 0.0
        %450 = vmatprep.subr.mxu0 0.0
        %451 = vmatpush2.msra.mxu0 0.0
        %452 = vmatprep.subr.mxu0 0.0
        %453 = vmatpush2.msra.mxu0 0.0
        %454 = vmatprep.subr.mxu0 0.0
        %455 = vmatpush2.msra.mxu0 0.0
        %456 = vmatprep.subr.mxu0 0.0
        %457 = vmatpush2.msra.mxu0 0.0
        %458 = vmatprep.subr.mxu0 0.0
        %459 = vmatpush2.msra.mxu0 0.0
        %460 = vmatprep.subr.mxu0 0.0
        %461 = vmatpush2.msra.mxu0 0.0
        %462 = vmatprep.subr.mxu0 0.0
        %463 = vmatpush2.msra.mxu0 0.0
        %464 = vmatprep.subr.mxu0 0.0
        %465 = vmatpush2.msra.mxu0 0.0
        %466 = vmatprep.subr.mxu0 0.0
        %467 = vmatpush2.msra.mxu0 0.0
        %468 = vmatprep.subr.mxu0 0.0
        %469 = vmatpush2.msra.mxu0 0.0
        %470 = vmatprep.mubr.f32.mxu0 0.0
        %471 = vmatmul.mubr.f32.gmra.mxu0 %v388
        %v472 = vpop.f32.mrf.mxu0
        %v473 = vadd.f32 0.0, %v472
        %v474 = vpop.f32.mrf.mxu0
        %475 = vdwg.mxu0
        %v476 = vadd.f32 %v389, %v473
        %477 = vst.msk [vmem:[#allocation2] sm:$0xff] %vm306, %v476
        // Predicated region
        $region45: #{tpu_custom_call.1} parent=39 // pred_check
          %p478 = pneg %p288
        $region46: #{tpu_custom_call.1} parent=39 // pred_check_branch
          %480 = sbr.rel (%p478) target = $region48
        $region47: #{tpu_custom_call.1} parent=39 // pred_region
          %v481 = vld [vmem:[#allocation2] sm:$0xff]
          %v482 = vld [vmem:[%s4] sm:$0x1]
          %v484 = vlaneseq
          %v485 = vshrl.u32 %v484, 7
          %v486 = vsub.s32 0, %v485
          %v487 = vrot.slane %v482, %v486
          %v489 = vadd.f32 %v481, %v487
          %490 = vst.msk [vmem:[%s269] sm:$0xff] %vm306, %v489
        $region48: #{tpu_custom_call.1} parent=39 // pred_fallthru
          _
        %s491 = sand.u32 %s164, 1
        %s492 = scalar_lea.sflag [#allocation4], %s491
        %s493 = sand.u32 %s164, 1
        %s494 = smul.addr %s493, 8
        %s495 = scalar_lea.vmem [#allocation3], %s494
        // Predicated region
        $region49: #{tpu_custom_call.1} parent=39 // pred_check
          %p496 = pneg %p174
        $region50: #{tpu_custom_call.1} parent=39 // pred_check_branch
          %498 = sbr.rel (%p496) target = $region52
        $region51: #{tpu_custom_call.1} parent=39 // pred_region
          %s500 = ssub.s32 128, 128
          %501 = vsyncadd %s492, %s500
          %s502 = smul.addr %s23, 128
          %s503 = scalar_lea.hbm %s5, %s502
          %s505 = sshll.u32 %s495, 4
          %s506 = int_to_ptr.vmem [resolvable:$true] %s505
          %508 = dma.vmem_to_hbm [thread:$0]  %s506, 128, %s503, %s492
        $region52: #{tpu_custom_call.1} parent=39 // pred_fallthru
          _
      $region40: #{tpu_custom_call.1} parent=5 // pred_fallthru
        _
      %p509 = scmp.le.s32.totalorder 2, %s14
      // Predicated region
      $region53: #{tpu_custom_call.1} parent=5 // pred_check
        %p510 = pneg %p509
      $region54: #{tpu_custom_call.1} parent=5 // pred_check_branch
        %512 = sbr.rel (%p510) target = $region56
      $region55: #{tpu_custom_call.1} parent=5 // pred_region
        %s513 = ssub.s32 %s14, 2
        // Predicated region
        $region57: #{tpu_custom_call.1} parent=55 // pred_check
          %p514 = pneg %p180
        $region58: #{tpu_custom_call.1} parent=55 // pred_check_branch
          %516 = sbr.rel (%p514) target = $region60
        $region59: #{tpu_custom_call.1} parent=55 // pred_region
          %s517 = sand.u32 %s165, 1
          %s518 = scalar_lea.sflag [#allocation4], %s517
          %s519 = sand.u32 %s165, 1
          %s520 = smul.addr %s519, 8
          %s521 = scalar_lea.vmem [#allocation3], %s520
          %522 = dma.done %s518, 128
        $region60: #{tpu_custom_call.1} parent=55 // pred_fallthru
          _
      $region56: #{tpu_custom_call.1} parent=5 // pred_fallthru
        _
    $region6: #{tpu_custom_call.1} parent=1 // loop_footer
      %s18 = sadd.s32 1, %s14
    $region7: #{tpu_custom_call.1} parent=1 // loop_footer_branch
      %13 = sbr.rel target = $region3
    $region8: #{tpu_custom_call.1} parent=1 // loop_exit
      _
    %523 = vsyncpa [#allocation4], 1
    %s524 = scalar_lea.sflag [#allocation4], 1
    %525 = vsyncpa %s524, 1

</llo_original>
